<compile_context>
chip_gen: v6e
topology: v6e:2x2x1
jax: 0.10.0
libtpu: 0.0.40
codegen_flags: <defaults>
</compile_context>

<pallas_src>
import functools

import jax
import jax.numpy as jnp
from jax.experimental import pallas as pl
from jax.experimental.pallas import tpu as pltpu


def _sdpa_kernel(q_ref, kt_ref, v_ref, mask_ref, ctx_ref, prob_ref, *,
                 scale, mxu_dtype):
    # Blocks ((b, h) dims squeezed away by the BlockSpecs):
    #   q_ref    : [TQ, D]
    #   kt_ref   : [D, Sk]        (K pre-transposed in the wrapper)
    #   v_ref    : [Sk, D]
    #   mask_ref : [TQ or 1, Sk]  int8, nonzero => masked
    q = q_ref[...]

    # Fold 1/sqrt(d_head) into Q: [TQ,D] multiplies instead of [TQ,Sk].
    q_scaled = (q * jnp.asarray(scale, dtype=q.dtype)).astype(mxu_dtype)

    # scores = (Q*scale) @ K^T — plain MXU matmul, f32 accumulation.
    scores = jnp.dot(q_scaled, kt_ref[...].astype(mxu_dtype),
                     preferred_element_type=jnp.float32)          # [TQ, Sk] f32

    # masked_fill_(attn_mask, -1e9); mask may be [1, Sk] (broadcast) or [TQ, Sk].
    scores = jnp.where(mask_ref[...] != 0, jnp.float32(-1000000000.0), scores)

    # Numerically stable softmax along keys (kept in f32).
    # TODO(synk): on v6e/v7x the exp/VPU block could run in bf16 once prob is
    #             emitted in bf16; kept f32 here to match reference semantics.
    m = jnp.max(scores, axis=-1, keepdims=True)
    e = jnp.exp(scores - m)
    denom = jnp.sum(e, axis=-1, keepdims=True)
    # EUP approximate reciprocal + one Newton step, cost only on a [TQ,1] column.
    inv = pl.reciprocal(denom, approx=True)
    inv = inv * (2.0 - denom * inv)
    prob = e * inv                                                # [TQ, Sk] f32

    # context = attn_prob @ V   (MXU, f32 accumulation)
    ctx = jnp.dot(prob.astype(mxu_dtype), v_ref[...].astype(mxu_dtype),
                  preferred_element_type=jnp.float32)             # [TQ, D] f32

    ctx_ref[...] = ctx.astype(ctx_ref.dtype)
    prob_ref[...] = prob.astype(prob_ref.dtype)


def _vmem_capacity_bytes():
    """Physical VMEM of the current chip; conservative 64 MiB (v7x) fallback."""
    try:
        info = pltpu.get_tpu_info()
        cap = getattr(info, "vmem_capacity_bytes", None)
        if cap:
            return int(cap)
    except Exception:
        pass
    return 64 * 1024 * 1024


def _per_step_vmem_bytes(tq, sk, dh, in_item, ctx_item, prob_item):
    """Double-buffered I/O streams + live f32 intermediates for one grid step."""
    return (2 * tq * dh * in_item          # Q tile
            + 2 * dh * sk * in_item        # K^T
            + 2 * sk * dh * in_item        # V
            + 2 * tq * sk * 1              # int8 mask tile (worst case)
            + 2 * tq * dh * ctx_item       # context out
            + 2 * tq * sk * prob_item      # attn_prob out (dominant)
            + 4 * tq * sk * 4)             # f32 intermediates (scores/e/prob/tmp)


def _choose_q_tile(sq, sk, dh, in_item, ctx_item, prob_item, tile_budget):
    """Pick TQ (multiple of 32: int8-mask sublane packing) and padded Sq."""
    if (sq <= 512 and
            _per_step_vmem_bytes(sq, sk, dh, in_item, ctx_item, prob_item) <= tile_budget):
        return sq, sq                                  # full extent, no padding
    for tq in (512, 384, 256, 128, 64, 32):
        if _per_step_vmem_bytes(tq, sk, dh, in_item, ctx_item, prob_item) <= tile_budget:
            return tq, -(-sq // tq) * tq
    tq = 32                                            # smallest legal tile
    return tq, -(-sq // tq) * tq


def scaled_dot_product_attention(Q, K, V, attn_mask, d_head, *,
                                 prob_dtype=None, mxu_dtype=None):
    """Q,K,V: [bs, n_head, S, d_head]; attn_mask broadcastable to
    [bs, n_head, Sq, Sk] (bool / int, nonzero = masked).

    Returns (context [bs, n_head, Sq, d_head], attn_prob [bs, n_head, Sq, Sk]).
    Defaults keep the PyTorch module's dtype semantics (outputs follow Q.dtype,
    matmuls in the input dtype).  `prob_dtype=jnp.bfloat16` halves the dominant
    HBM writeback; `mxu_dtype=jnp.bfloat16` speeds up the MXU passes.
    """
    bs, n_head, sq, dh = Q.shape
    sk = K.shape[2]

    in_dtype = Q.dtype
    ctx_dtype = in_dtype
    prob_dtype = jnp.dtype(in_dtype if prob_dtype is None else prob_dtype)
    mxu_dtype = jnp.dtype(in_dtype if mxu_dtype is None else mxu_dtype)

    # ---- mask: keep broadcast dims unbroadcast; sanitize to {0,1} int8 ------
    mask = jnp.asarray(attn_mask)
    mask = (mask != 0).astype(jnp.int8)
    if mask.ndim < 4:
        mask = mask.reshape((1,) * (4 - mask.ndim) + mask.shape)
    if mask.shape[-1] != sk:                       # key dim must be full inside
        mask = jnp.broadcast_to(mask, mask.shape[:-1] + (sk,))
    mb, mh, mq, _ = mask.shape
    assert mb in (1, bs) and mh in (1, n_head) and mq in (1, sq), (
        "attn_mask must be broadcastable to [bs, n_head, Sq, Sk]")

    # ---- generation-aware VMEM budget and q-tile choice ---------------------
    in_item = jnp.dtype(in_dtype).itemsize
    ctx_item = jnp.dtype(ctx_dtype).itemsize
    prob_item = prob_dtype.itemsize

    vmem_cap = _vmem_capacity_bytes()
    vmem_budget = int(0.85 * vmem_cap)          # never request > ~85% of physical VMEM
    tile_budget = int(0.70 * vmem_budget)       # headroom for compiler scratch
    tq, sq_pad = _choose_q_tile(sq, sk, dh, in_item, ctx_item, prob_item, tile_budget)
    n_q = sq_pad // tq

    # Pad queries so TQ divides Sq exactly; padded rows are sliced off after the
    # call (keys are never padded, so softmax on padded rows stays finite).
    if sq_pad != sq:
        pad = sq_pad - sq
        Q = jnp.pad(Q, ((0, 0), (0, 0), (0, pad), (0, 0)))
        if mq > 1:
            mask = jnp.pad(mask, ((0, 0), (0, 0), (0, pad), (0, 0)))
            mq = sq_pad

    # K pre-transposed ONCE in the wrapper -> plain MXU matmul in the kernel,
    # no per-q-tile cross-lane (XLU) transpose.  One-time O(BH*Sk*dh) copy,
    # negligible vs the O(BH*Sq*Sk) attn_prob writeback.
    k_t = jnp.swapaxes(K, -1, -2)               # [bs, n_head, dh, Sk]

    scale = 1.0 / (float(d_head) ** 0.5)

    est = _per_step_vmem_bytes(tq, sk, dh, in_item, ctx_item, prob_item)
    vmem_limit = int(min(max(int(1.5 * est), 32 * 1024 * 1024), vmem_budget))

    mq_blk = tq if mq > 1 else 1

    def q_map(b, h, qi):
        return (b, h, qi, 0)

    def kv_map(b, h, qi):
        return (b, h, 0, 0)

    def mask_map(b, h, qi):
        return (b if mb > 1 else 0, h if mh > 1 else 0, qi if mq > 1 else 0, 0)

    kernel = functools.partial(_sdpa_kernel, scale=scale, mxu_dtype=mxu_dtype)

    context, attn_prob = pl.pallas_call(
        kernel,
        out_shape=(
            jax.ShapeDtypeStruct((bs, n_head, sq_pad, dh), ctx_dtype),
            jax.ShapeDtypeStruct((bs, n_head, sq_pad, sk), prob_dtype),
        ),
        grid_spec=pltpu.PrefetchScalarGridSpec(
            num_scalar_prefetch=0,
            grid=(bs, n_head, n_q),
            in_specs=[
                pl.BlockSpec((None, None, tq, dh), q_map),        # Q tile
                pl.BlockSpec((None, None, dh, sk), kv_map),       # K^T (resident over qi)
                pl.BlockSpec((None, None, sk, dh), kv_map),       # V   (resident over qi)
                pl.BlockSpec((None, None, mq_blk, sk), mask_map), # mask (unbroadcast)
            ],
            out_specs=[
                pl.BlockSpec((None, None, tq, dh), q_map),        # context
                pl.BlockSpec((None, None, tq, sk), q_map),        # attn_prob
            ],
        ),
        compiler_params=pltpu.CompilerParams(
            # qi kept "arbitrary" so megacore (v7x) shards over (bs, n_head),
            # preserving K/V block residency across the inner qi loop per core.
            dimension_semantics=("parallel", "parallel", "arbitrary"),
            vmem_limit_bytes=vmem_limit),
    )(Q, k_t, V, mask)

    if sq_pad != sq:
        context = context[:, :, :sq, :]
        attn_prob = attn_prob[:, :, :sq, :]
    return context, attn_prob


def _reference(Q, K, V, attn_mask, d_head):
    scale = 1.0 / (float(d_head) ** 0.5)
    scores = jnp.einsum("bhqd,bhkd->bhqk", Q, K) * scale
    scores = jnp.where(attn_mask, -1000000000.0, scores)
    prob = jax.nn.softmax(scores, axis=-1)
    ctx = jnp.einsum("bhqk,bhkd->bhqd", prob, V)
    return ctx, prob


if __name__ == "__main__":
    # Small shapes consistent with the module: bs=2, n_head=2, seq=8, d_head=32
    bs, n_head, seq, d_head = 2, 2, 8, 32

    key = jax.random.PRNGKey(0)
    kq, kk, kv, km = jax.random.split(key, 4)
    Q = jax.random.normal(kq, (bs, n_head, seq, d_head), dtype=jnp.float32)
    K = jax.random.normal(kk, (bs, n_head, seq, d_head), dtype=jnp.float32)
    V = jax.random.normal(kv, (bs, n_head, seq, d_head), dtype=jnp.float32)

    # 1) full [bs, n_head, Sq, Sk] mask
    attn_mask = jax.random.bernoulli(km, p=0.2, shape=(bs, n_head, seq, seq))
    context, attn_prob = scaled_dot_product_attention(Q, K, V, attn_mask, d_head)
    jax.block_until_ready(context)
    jax.block_until_ready(attn_prob)
    ctx_ref, prob_ref = _reference(Q, K, V, attn_mask, d_head)
    assert jnp.allclose(context, ctx_ref, atol=1e-4, rtol=1e-4)
    assert jnp.allclose(attn_prob, prob_ref, atol=1e-4, rtol=1e-4)

    # 2) broadcastable padding-style mask [bs, 1, 1, Sk], streamed unbroadcast
    pad_mask = jax.random.bernoulli(km, p=0.2, shape=(bs, 1, 1, seq))
    context2, attn_prob2 = scaled_dot_product_attention(Q, K, V, pad_mask, d_head)
    jax.block_until_ready(context2)
    jax.block_until_ready(attn_prob2)
    full_mask = jnp.broadcast_to(pad_mask, (bs, n_head, seq, seq))
    ctx_ref2, prob_ref2 = _reference(Q, K, V, full_mask, d_head)
    assert jnp.allclose(context2, ctx_ref2, atol=1e-4, rtol=1e-4)
    assert jnp.allclose(attn_prob2, prob_ref2, atol=1e-4, rtol=1e-4)

    print("KERNEL_OK")
</pallas_src>

<mosaic_0001>
module attributes {stable_mosaic.version = 11 : i64} {
  func.func @_sdpa_kernel(%arg0: i32, %arg1: i32, %arg2: i32, %arg3: memref<1x1x8x32xf32, #tpu.memory_space<vmem>>, %arg4: memref<1x1x32x8xf32, #tpu.memory_space<vmem>>, %arg5: memref<1x1x8x32xf32, #tpu.memory_space<vmem>>, %arg6: memref<1x1x8x8xi8, #tpu.memory_space<vmem>>, %arg7: memref<1x1x8x32xf32, #tpu.memory_space<vmem>>, %arg8: memref<1x1x8x8xf32, #tpu.memory_space<vmem>>) attributes {dimension_semantics = [#tpu.dimension_semantics<parallel>, #tpu.dimension_semantics<parallel>, #tpu.dimension_semantics<arbitrary>], iteration_bounds = array<i64: 2, 2, 1>, scalar_prefetch = 0 : i64, scratch_operands = 0 : i64, tpu.core_type = #tpu.core_type<tc>, window_params = [{transform_indices = @transform_0, window_bounds = array<i64: 1, 1, 8, 32>}, {transform_indices = @transform_1, window_bounds = array<i64: 1, 1, 32, 8>}, {transform_indices = @transform_2, window_bounds = array<i64: 1, 1, 8, 32>}, {transform_indices = @transform_3, window_bounds = array<i64: 1, 1, 8, 8>}, {transform_indices = @transform_4, window_bounds = array<i64: 1, 1, 8, 32>}, {transform_indices = @transform_5, window_bounds = array<i64: 1, 1, 8, 8>}]} {
    %c0 = arith.constant 0 : index
    %c0_0 = arith.constant 0 : index
    %c0_1 = arith.constant 0 : index
    %c0_2 = arith.constant 0 : index
    %0 = vector.load %arg3[%c0, %c0_0, %c0_1, %c0_2] : memref<1x1x8x32xf32, #tpu.memory_space<vmem>>, vector<1x1x8x32xf32>
    %1 = vector.shape_cast %0 : vector<1x1x8x32xf32> to vector<8x32xf32>
    %cst = arith.constant 0.176776692 : f32
    %2 = vector.broadcast %cst : f32 to vector<8x32xf32>
    %3 = arith.mulf %1, %2 : vector<8x32xf32>
    %c0_3 = arith.constant 0 : index
    %c0_4 = arith.constant 0 : index
    %c0_5 = arith.constant 0 : index
    %c0_6 = arith.constant 0 : index
    %4 = vector.load %arg4[%c0_3, %c0_4, %c0_5, %c0_6] : memref<1x1x32x8xf32, #tpu.memory_space<vmem>>, vector<1x1x32x8xf32>
    %5 = vector.shape_cast %4 : vector<1x1x32x8xf32> to vector<32x8xf32>
    %cst_7 = arith.constant dense<0.000000e+00> : vector<8x8xf32>
    %6 = tpu.matmul %3, %5, %cst_7 {dimension_numbers = #tpu.dot_dimension_numbers<[1], [0], [0], [1], [0, 0, 1, 1], [], []>} : vector<8x32xf32>, vector<32x8xf32>, vector<8x8xf32> -> vector<8x8xf32>
    %c0_8 = arith.constant 0 : index
    %c0_9 = arith.constant 0 : index
    %c0_10 = arith.constant 0 : index
    %c0_11 = arith.constant 0 : index
    %7 = vector.load %arg6[%c0_8, %c0_9, %c0_10, %c0_11] : memref<1x1x8x8xi8, #tpu.memory_space<vmem>>, vector<1x1x8x8xi8>
    %8 = vector.shape_cast %7 : vector<1x1x8x8xi8> to vector<8x8xi8>
    %c0_i8 = arith.constant 0 : i8
    %9 = vector.broadcast %c0_i8 : i8 to vector<8x8xi8>
    %10 = arith.cmpi ne, %8, %9 : vector<8x8xi8>
    %cst_12 = arith.constant -1.000000e+09 : f32
    %11 = vector.broadcast %cst_12 : f32 to vector<8x8xf32>
    %12 = arith.select %10, %11, %6 : vector<8x8xi1>, vector<8x8xf32>
    %cst_13 = arith.constant dense<0xFF800000> : vector<8xf32>
    %13 = vector.multi_reduction <maximumf>, %12, %cst_13 [1] : vector<8x8xf32> to vector<8xf32>
    %14 = vector.shape_cast %13 : vector<8xf32> to vector<8x1xf32>
    %15 = vector.broadcast %14 : vector<8x1xf32> to vector<8x8xf32>
    %16 = arith.subf %12, %15 : vector<8x8xf32>
    %17 = math.exp %16 : vector<8x8xf32>
    %cst_14 = arith.constant dense<0.000000e+00> : vector<8xf32>
    %18 = vector.multi_reduction <add>, %17, %cst_14 [1] : vector<8x8xf32> to vector<8xf32>
    %19 = vector.shape_cast %18 : vector<8xf32> to vector<8x1xf32>
    %20 = tpu.reciprocal %19 {approx = true} : vector<8x1xf32> -> vector<8x1xf32>
    %21 = arith.mulf %19, %20 : vector<8x1xf32>
    %cst_15 = arith.constant 2.000000e+00 : f32
    %22 = vector.broadcast %cst_15 : f32 to vector<8x1xf32>
    %23 = arith.subf %22, %21 : vector<8x1xf32>
    %24 = arith.mulf %20, %23 : vector<8x1xf32>
    %25 = vector.broadcast %24 : vector<8x1xf32> to vector<8x8xf32>
    %26 = arith.mulf %17, %25 : vector<8x8xf32>
    %c0_16 = arith.constant 0 : index
    %c0_17 = arith.constant 0 : index
    %c0_18 = arith.constant 0 : index
    %c0_19 = arith.constant 0 : index
    %27 = vector.load %arg5[%c0_16, %c0_17, %c0_18, %c0_19] : memref<1x1x8x32xf32, #tpu.memory_space<vmem>>, vector<1x1x8x32xf32>
    %28 = vector.shape_cast %27 : vector<1x1x8x32xf32> to vector<8x32xf32>
    %cst_20 = arith.constant dense<0.000000e+00> : vector<8x32xf32>
    %29 = tpu.matmul %26, %28, %cst_20 {dimension_numbers = #tpu.dot_dimension_numbers<[1], [0], [0], [1], [0, 0, 1, 1], [], []>} : vector<8x8xf32>, vector<8x32xf32>, vector<8x32xf32> -> vector<8x32xf32>
    %c0_21 = arith.constant 0 : index
    %c0_22 = arith.constant 0 : index
    %c0_23 = arith.constant 0 : index
    %c0_24 = arith.constant 0 : index
    %30 = vector.load %arg7[%c0_21, %c0_22, %c0_23, %c0_24] : memref<1x1x8x32xf32, #tpu.memory_space<vmem>>, vector<1x1x8x32xf32>
    %31 = vector.shape_cast %30 : vector<1x1x8x32xf32> to vector<8x32xf32>
    %32 = vector.shape_cast %29 : vector<8x32xf32> to vector<1x1x8x32xf32>
    tpu.vector_store %arg7[%c0_21, %c0_22, %c0_23, %c0_24], %32 {strides = array<i32>} : memref<1x1x8x32xf32, #tpu.memory_space<vmem>>, vector<1x1x8x32xf32>,
    %c0_25 = arith.constant 0 : index
    %c0_26 = arith.constant 0 : index
    %c0_27 = arith.constant 0 : index
    %c0_28 = arith.constant 0 : index
    %33 = vector.load %arg8[%c0_25, %c0_26, %c0_27, %c0_28] : memref<1x1x8x8xf32, #tpu.memory_space<vmem>>, vector<1x1x8x8xf32>
    %34 = vector.shape_cast %33 : vector<1x1x8x8xf32> to vector<8x8xf32>
    %35 = vector.shape_cast %26 : vector<8x8xf32> to vector<1x1x8x8xf32>
    tpu.vector_store %arg8[%c0_25, %c0_26, %c0_27, %c0_28], %35 {strides = array<i32>} : memref<1x1x8x8xf32, #tpu.memory_space<vmem>>, vector<1x1x8x8xf32>,
    return
  }
  func.func @transform_0(%arg0: i32, %arg1: i32, %arg2: i32) -> (i32, i32, i32, i32) {
    %c0_i32 = arith.constant 0 : i32
    %c0_i32_0 = arith.constant 0 : i32
    return %arg0, %arg1, %arg2, %c0_i32 : i32, i32, i32, i32
  }
  func.func @transform_1(%arg0: i32, %arg1: i32, %arg2: i32) -> (i32, i32, i32, i32) {
    %c0_i32 = arith.constant 0 : i32
    %c0_i32_0 = arith.constant 0 : i32
    %c0_i32_1 = arith.constant 0 : i32
    return %arg0, %arg1, %c0_i32, %c0_i32_0 : i32, i32, i32, i32
  }
  func.func @transform_2(%arg0: i32, %arg1: i32, %arg2: i32) -> (i32, i32, i32, i32) {
    %c0_i32 = arith.constant 0 : i32
    %c0_i32_0 = arith.constant 0 : i32
    %c0_i32_1 = arith.constant 0 : i32
    return %arg0, %arg1, %c0_i32, %c0_i32_0 : i32, i32, i32, i32
  }
  func.func @transform_3(%arg0: i32, %arg1: i32, %arg2: i32) -> (i32, i32, i32, i32) {
    %c0_i32 = arith.constant 0 : i32
    %c0_i32_0 = arith.constant 0 : i32
    return %arg0, %arg1, %arg2, %c0_i32 : i32, i32, i32, i32
  }
  func.func @transform_4(%arg0: i32, %arg1: i32, %arg2: i32) -> (i32, i32, i32, i32) {
    %c0_i32 = arith.constant 0 : i32
    %c0_i32_0 = arith.constant 0 : i32
    return %arg0, %arg1, %arg2, %c0_i32 : i32, i32, i32, i32
  }
  func.func @transform_5(%arg0: i32, %arg1: i32, %arg2: i32) -> (i32, i32, i32, i32) {
    %c0_i32 = arith.constant 0 : i32
    %c0_i32_0 = arith.constant 0 : i32
    return %arg0, %arg1, %arg2, %c0_i32 : i32, i32, i32, i32
  }
}

</mosaic_0001>

<llo_original>
// kernel: tpu_custom_call.1
$region0: #{tpu_custom_call.1}
  #allocation0 [shape = 'u32[]', space=smem, size = 0x4, offset = 0x4, fixed_abs, tag = 'smem constant byte address 0x4 - core index']
  #allocation1 [shape = 'u32[144,128]{1,0:T(1,128)}', space=vmem, size = 0x12000, scoped, tag = 'internal scratch']
  %s0 = inlined_call_operand.vmem [shape: f32[2,2,8,32], index: 0, kind: input, shape index: {}]
  %s1 = inlined_call_operand.vmem [shape: f32[2,2,32,8], index: 1, kind: input, shape index: {}]
  %s2 = inlined_call_operand.vmem [shape: f32[2,2,8,32], index: 2, kind: input, shape index: {}]
  %s3 = inlined_call_operand.vmem [shape: s8[2,2,8,8], index: 3, kind: input, shape index: {}]
  %s4 = inlined_call_operand.hbm [shape: f32[2,2,8,32], index: 4, kind: output, shape index: {0}]
  %s5 = inlined_call_operand.hbm [shape: f32[2,2,8,8], index: 5, kind: output, shape index: {1}]
  %6 = xla_tuple %s4, %s5
  %s7 = sld [smem:[#allocation0]]
  $region57: #{tpu_custom_call.1} parent=0
    _
  %s9 = ssub.s32 1, %s7
  %s10 = scalar_select 0, %s9, %s7
  $region1: #{tpu_custom_call.1} parent=0
    #allocation2 [shape = 'u8[8192]{0}', space=vmem, size = 0x2000, scoped, tag = 'output window, operand 0']
    #allocation3 [shape = 's32[2]{0}', space=sflag, size = 0x8, scoped, tag = 'scoped memory for tpu_custom_call.1']
    #allocation4 [shape = 'u8[8192]{0}', space=vmem, size = 0x2000, scoped, tag = 'output window, operand 1']
    #allocation5 [shape = 's32[2]{0}', space=sflag, size = 0x8, scoped, tag = 'scoped memory for tpu_custom_call.1']
    %11 = vsyncpa [#allocation3], 0
    %s12 = scalar_lea.sflag [#allocation3], 1
    %13 = vsyncpa %s12, 0
    %14 = vsyncpa [#allocation5], 0
    %s15 = scalar_lea.sflag [#allocation5], 1
    %16 = vsyncpa %s15, 0
    loop: start=0, step=1, limit=6
    $region2: #{tpu_custom_call.1} parent=1 // loop_pre_header
      _
    $region3: #{tpu_custom_call.1} parent=1 // loop_header
      %s18 = sphi 0, %s22
      %p19 = scmp.ge.s32.totalorder %s18, 6
      %s25 = sphi 0, %s44
      %s26 = sphi 0, %s40
      %s27 = sphi 0, %s36
      %s28 = sphi 0, %s25
      %s29 = sphi 0, %s26
      %s30 = sphi 0, %s27
      %s31 = sphi 0, %s28
      %s32 = sphi 0, %s29
      %s33 = sphi 0, %s30
      %s51 = sphi 0, %s53
      %s54 = sphi 0, %s51
      %s55 = sphi 0, %s54
      %s71 = sphi 0, %s55
      %s79 = sphi 0, %s81
      %s82 = sphi 0, %s79
      %s83 = sphi 0, %s82
      %s99 = sphi 0, %s83
      %s107 = sphi 0, %s109
      %s110 = sphi 0, %s107
      %s111 = sphi 0, %s110
      %s127 = sphi 0, %s111
      %s137 = sphi 0, %s139
      %s140 = sphi 0, %s137
      %s141 = sphi 0, %s140
      %s157 = sphi 0, %s141
      %s167 = sphi 0, %s169
      %s170 = sphi 0, %s167
      %s171 = sphi 0, %s170
      %s187 = sphi 0, %s171
      %s197 = sphi 0, %s199
      %s200 = sphi 0, %s197
      %s201 = sphi 0, %s200
      %s217 = sphi 0, %s201
    $region4: #{tpu_custom_call.1} parent=1 // loop_header_branch
      %21 = sbr.rel (%p19) target = $region8
    $region5: #{tpu_custom_call.1} parent=1 // loop_body
      %s23 = ssub.s32 %s18, 1
      %s24 = ssub.s32 %s18, 2
      %s34 = sadd.s32 1, %s27
      %p35 = scmp.ge.s32.totalorder %s34, 1
      %s36 = scalar_select %p35, 0, %s34
      %s37 = sadd.s32 1, %s26
      %s38 = scalar_select %p35, %s37, %s26
      %p39 = scmp.ge.s32.totalorder %s38, 2
      %s40 = scalar_select %p39, 0, %s38
      %s41 = sadd.s32 1, %s25
      %s42 = scalar_select %p39, %s41, %s25
      %p43 = scmp.ge.s32.totalorder %s42, 2
      %s44 = scalar_select %p43, 0, %s42
      %s45 = ssub.s32 %s25, %s44
      %s46 = ssub.s32 %s26, %s40
      %s47 = sor.u32 %s45, %s46
      %s48 = ssub.s32 %s27, %s36
      %s49 = sor.u32 %s47, %s48
      %p50 = scmp.eq.s32.totalorder %s49, 0
      %s52 = sadd.s32 %s51, 1
      %s53 = scalar_select %p50, %s51, %s52
      %p56 = pneg %p50
      %p57 = scmp.eq.s32.totalorder %s18, 3
      %p58 = por %p56, %p57
      %p59 = scmp.ne.s32.totalorder %s51, %s54
      %p60 = scmp.eq.s32.totalorder %s18, 0
      %p61 = por %p59, %p60
      %p62 = scmp.ne.s32.totalorder %s51, %s54
      %p63 = scmp.eq.s32.totalorder %s23, 3
      %p64 = por %p62, %p63
      %p65 = scmp.ne.s32.totalorder %s54, %s55
      %p66 = scmp.eq.s32.totalorder %s23, 0
      %p67 = por %p65, %p66
      %p68 = scmp.ne.s32.totalorder %s54, %s55
      %p69 = scmp.eq.s32.totalorder %s24, 3
      %p70 = por %p68, %p69
      %p72 = scmp.ne.s32.totalorder %s55, %s71
      %p73 = scmp.eq.s32.totalorder %s24, 0
      %p74 = por %p72, %p73
      %s75 = ssub.s32 %s25, %s44
      %s76 = ssub.s32 %s26, %s40
      %s77 = sor.u32 %s75, %s76
      %p78 = scmp.eq.s32.totalorder %s77, 0
      %s80 = sadd.s32 %s79, 1
      %s81 = scalar_select %p78, %s79, %s80
      %p84 = pneg %p78
      %p85 = scmp.eq.s32.totalorder %s18, 3
      %p86 = por %p84, %p85
      %p87 = scmp.ne.s32.totalorder %s79, %s82
      %p88 = scmp.eq.s32.totalorder %s18, 0
      %p89 = por %p87, %p88
      %p90 = scmp.ne.s32.totalorder %s79, %s82
      %p91 = scmp.eq.s32.totalorder %s23, 3
      %p92 = por %p90, %p91
      %p93 = scmp.ne.s32.totalorder %s82, %s83
      %p94 = scmp.eq.s32.totalorder %s23, 0
      %p95 = por %p93, %p94
      %p96 = scmp.ne.s32.totalorder %s82, %s83
      %p97 = scmp.eq.s32.totalorder %s24, 3
      %p98 = por %p96, %p97
      %p100 = scmp.ne.s32.totalorder %s83, %s99
      %p101 = scmp.eq.s32.totalorder %s24, 0
      %p102 = por %p100, %p101
      %s103 = ssub.s32 %s25, %s44
      %s104 = ssub.s32 %s26, %s40
      %s105 = sor.u32 %s103, %s104
      %p106 = scmp.eq.s32.totalorder %s105, 0
      %s108 = sadd.s32 %s107, 1
      %s109 = scalar_select %p106, %s107, %s108
      %p112 = pneg %p106
      %p113 = scmp.eq.s32.totalorder %s18, 3
      %p114 = por %p112, %p113
      %p115 = scmp.ne.s32.totalorder %s107, %s110
      %p116 = scmp.eq.s32.totalorder %s18, 0
      %p117 = por %p115, %p116
      %p118 = scmp.ne.s32.totalorder %s107, %s110
      %p119 = scmp.eq.s32.totalorder %s23, 3
      %p120 = por %p118, %p119
      %p121 = scmp.ne.s32.totalorder %s110, %s111
      %p122 = scmp.eq.s32.totalorder %s23, 0
      %p123 = por %p121, %p122
      %p124 = scmp.ne.s32.totalorder %s110, %s111
      %p125 = scmp.eq.s32.totalorder %s24, 3
      %p126 = por %p124, %p125
      %p128 = scmp.ne.s32.totalorder %s111, %s127
      %p129 = scmp.eq.s32.totalorder %s24, 0
      %p130 = por %p128, %p129
      %s131 = ssub.s32 %s25, %s44
      %s132 = ssub.s32 %s26, %s40
      %s133 = sor.u32 %s131, %s132
      %s134 = ssub.s32 %s27, %s36
      %s135 = sor.u32 %s133, %s134
      %p136 = scmp.eq.s32.totalorder %s135, 0
      %s138 = sadd.s32 %s137, 1
      %s139 = scalar_select %p136, %s137, %s138
      %p142 = pneg %p136
      %p143 = scmp.eq.s32.totalorder %s18, 3
      %p144 = por %p142, %p143
      %p145 = scmp.ne.s32.totalorder %s137, %s140
      %p146 = scmp.eq.s32.totalorder %s18, 0
      %p147 = por %p145, %p146
      %p148 = scmp.ne.s32.totalorder %s137, %s140
      %p149 = scmp.eq.s32.totalorder %s23, 3
      %p150 = por %p148, %p149
      %p151 = scmp.ne.s32.totalorder %s140, %s141
      %p152 = scmp.eq.s32.totalorder %s23, 0
      %p153 = por %p151, %p152
      %p154 = scmp.ne.s32.totalorder %s140, %s141
      %p155 = scmp.eq.s32.totalorder %s24, 3
      %p156 = por %p154, %p155
      %p158 = scmp.ne.s32.totalorder %s141, %s157
      %p159 = scmp.eq.s32.totalorder %s24, 0
      %p160 = por %p158, %p159
      %s161 = ssub.s32 %s25, %s44
      %s162 = ssub.s32 %s26, %s40
      %s163 = sor.u32 %s161, %s162
      %s164 = ssub.s32 %s27, %s36
      %s165 = sor.u32 %s163, %s164
      %p166 = scmp.eq.s32.totalorder %s165, 0
      %s168 = sadd.s32 %s167, 1
      %s169 = scalar_select %p166, %s167, %s168
      %p172 = pneg %p166
      %p173 = scmp.eq.s32.totalorder %s18, 3
      %p174 = por %p172, %p173
      %p175 = scmp.ne.s32.totalorder %s167, %s170
      %p176 = scmp.eq.s32.totalorder %s18, 0
      %p177 = por %p175, %p176
      %p178 = scmp.ne.s32.totalorder %s167, %s170
      %p179 = scmp.eq.s32.totalorder %s23, 3
      %p180 = por %p178, %p179
      %p181 = scmp.ne.s32.totalorder %s170, %s171
      %p182 = scmp.eq.s32.totalorder %s23, 0
      %p183 = por %p181, %p182
      %p184 = scmp.ne.s32.totalorder %s170, %s171
      %p185 = scmp.eq.s32.totalorder %s24, 3
      %p186 = por %p184, %p185
      %p188 = scmp.ne.s32.totalorder %s171, %s187
      %p189 = scmp.eq.s32.totalorder %s24, 0
      %p190 = por %p188, %p189
      %s191 = ssub.s32 %s25, %s44
      %s192 = ssub.s32 %s26, %s40
      %s193 = sor.u32 %s191, %s192
      %s194 = ssub.s32 %s27, %s36
      %s195 = sor.u32 %s193, %s194
      %p196 = scmp.eq.s32.totalorder %s195, 0
      %s198 = sadd.s32 %s197, 1
      %s199 = scalar_select %p196, %s197, %s198
      %p202 = pneg %p196
      %p203 = scmp.eq.s32.totalorder %s18, 3
      %p204 = por %p202, %p203
      %p205 = scmp.ne.s32.totalorder %s197, %s200
      %p206 = scmp.eq.s32.totalorder %s18, 0
      %p207 = por %p205, %p206
      %p208 = scmp.ne.s32.totalorder %s197, %s200
      %p209 = scmp.eq.s32.totalorder %s23, 3
      %p210 = por %p208, %p209
      %p211 = scmp.ne.s32.totalorder %s200, %s201
      %p212 = scmp.eq.s32.totalorder %s23, 0
      %p213 = por %p211, %p212
      %p214 = scmp.ne.s32.totalorder %s200, %s201
      %p215 = scmp.eq.s32.totalorder %s24, 3
      %p216 = por %p214, %p215
      %p218 = scmp.ne.s32.totalorder %s201, %s217
      %p219 = scmp.eq.s32.totalorder %s24, 0
      %p220 = por %p218, %p219
      %p221 = scmp.le.s32.totalorder 1, %s18
      %p222 = scmp.lt.s32.totalorder %s18, 5
      %p223 = pnand %p221, %p222
      %p224 = pneg %p223
      // Predicated region
      $region9: #{tpu_custom_call.1} parent=5 // pred_check
        _
      $region10: #{tpu_custom_call.1} parent=5 // pred_check_branch
        %226 = sbr.rel (%p223) target = $region12
      $region11: #{tpu_custom_call.1} parent=5 // pred_region
        %s227 = ssub.s32 %s18, 1
      $region12: #{tpu_custom_call.1} parent=5 // pred_fallthru
        _
      %p228 = scmp.lt.s32.totalorder %s18, 4
      // Predicated region
      $region13: #{tpu_custom_call.1} parent=5 // pred_check
        %p229 = pneg %p228
      $region14: #{tpu_custom_call.1} parent=5 // pred_check_branch
        %231 = sbr.rel (%p229) target = $region16
      $region15: #{tpu_custom_call.1} parent=5 // pred_region
        // Predicated region
        $region17: #{tpu_custom_call.1} parent=15 // pred_check
          %p232 = pneg %p61
        $region18: #{tpu_custom_call.1} parent=15 // pred_check_branch
          %234 = sbr.rel (%p232) target = $region20
        $region19: #{tpu_custom_call.1} parent=15 // pred_region
          %p235 = scmp.lt.s32.totalorder %s25, 1
          %s236 = scalar_select %p235, %s25, 1
          %p237 = scmp.lt.s32.totalorder %s26, 1
          %s238 = scalar_select %p237, %s26, 1
          %p239 = scmp.lt.s32.totalorder %s27, 0
          %s240 = scalar_select %p239, %s27, 0
          %s241 = sadd.s32 %s240, %s238
          %s242 = smul.addr %s236, 2
          %s243 = sadd.s32 %s241, %s242
          %s244 = smul.addr %s243, 8
          %s245 = scalar_lea.vmem %s0, %s244
        $region20: #{tpu_custom_call.1} parent=15 // pred_fallthru
          _
        // Predicated region
        $region21: #{tpu_custom_call.1} parent=15 // pred_check
          %p246 = pneg %p89
        $region22: #{tpu_custom_call.1} parent=15 // pred_check_branch
          %248 = sbr.rel (%p246) target = $region24
        $region23: #{tpu_custom_call.1} parent=15 // pred_region
          %p249 = scmp.lt.s32.totalorder %s25, 1
          %s250 = scalar_select %p249, %s25, 1
          %p251 = scmp.lt.s32.totalorder %s26, 1
          %s252 = scalar_select %p251, %s26, 1
          %s253 = smul.addr %s252, 4
          %s254 = smul.addr %s250, 8
          %s255 = sadd.s32 %s253, %s254
          %s256 = smul.addr %s255, 8
          %s257 = scalar_lea.vmem %s1, %s256
        $region24: #{tpu_custom_call.1} parent=15 // pred_fallthru
          _
        // Predicated region
        $region25: #{tpu_custom_call.1} parent=15 // pred_check
          %p258 = pneg %p117
        $region26: #{tpu_custom_call.1} parent=15 // pred_check_branch
          %260 = sbr.rel (%p258) target = $region28
        $region27: #{tpu_custom_call.1} parent=15 // pred_region
          %p261 = scmp.lt.s32.totalorder %s25, 1
          %s262 = scalar_select %p261, %s25, 1
          %p263 = scmp.lt.s32.totalorder %s26, 1
          %s264 = scalar_select %p263, %s26, 1
          %s265 = smul.addr %s262, 2
          %s266 = sadd.s32 %s264, %s265
          %s267 = smul.addr %s266, 8
          %s268 = scalar_lea.vmem %s2, %s267
        $region28: #{tpu_custom_call.1} parent=15 // pred_fallthru
          _
        // Predicated region
        $region29: #{tpu_custom_call.1} parent=15 // pred_check
          %p269 = pneg %p147
        $region30: #{tpu_custom_call.1} parent=15 // pred_check_branch
          %271 = sbr.rel (%p269) target = $region32
        $region31: #{tpu_custom_call.1} parent=15 // pred_region
          %p272 = scmp.lt.s32.totalorder %s25, 1
          %s273 = scalar_select %p272, %s25, 1
          %p274 = scmp.lt.s32.totalorder %s26, 1
          %s275 = scalar_select %p274, %s26, 1
          %p276 = scmp.lt.s32.totalorder %s27, 0
          %s277 = scalar_select %p276, %s27, 0
          %s278 = sadd.s32 %s277, %s275
          %s279 = smul.addr %s273, 2
          %s280 = sadd.s32 %s278, %s279
          %s281 = smul.addr %s280, 2
          %s282 = scalar_lea.vmem %s3, %s281
        $region32: #{tpu_custom_call.1} parent=15 // pred_fallthru
          _
      $region16: #{tpu_custom_call.1} parent=5 // pred_fallthru
        _
      %p283 = scmp.le.s32.totalorder 1, %s18
      %p284 = scmp.lt.s32.totalorder %s18, 5
      %p285 = pnand %p283, %p284
      %p286 = pneg %p285
      // Predicated region
      $region33: #{tpu_custom_call.1} parent=5 // pred_check
        _
      $region34: #{tpu_custom_call.1} parent=5 // pred_check_branch
        %288 = sbr.rel (%p285) target = $region36
      $region35: #{tpu_custom_call.1} parent=5 // pred_region
        %s289 = ssub.s32 %s18, 1
        %p290 = scmp.lt.s32.totalorder %s28, 1
        %s291 = scalar_select %p290, %s28, 1
        %p292 = scmp.lt.s32.totalorder %s29, 1
        %s293 = scalar_select %p292, %s29, 1
        %p294 = scmp.lt.s32.totalorder %s30, 0
        %s295 = scalar_select %p294, %s30, 0
        %s296 = sadd.s32 %s295, %s293
        %s297 = smul.addr %s291, 2
        %s298 = sadd.s32 %s296, %s297
        %s299 = smul.addr %s298, 8
        %s300 = scalar_lea.vmem %s0, %s299
        %p301 = pneg %p67
        %p302 = pneg %p64
        %p303 = scmp.lt.s32.totalorder %s28, 1
        %s304 = scalar_select %p303, %s28, 1
        %p305 = scmp.lt.s32.totalorder %s29, 1
        %s306 = scalar_select %p305, %s29, 1
        %s307 = smul.addr %s306, 4
        %s308 = smul.addr %s304, 8
        %s309 = sadd.s32 %s307, %s308
        %s310 = smul.addr %s309, 8
        %s311 = scalar_lea.vmem %s1, %s310
        %p312 = pneg %p95
        %p313 = pneg %p92
        %p314 = scmp.lt.s32.totalorder %s28, 1
        %s315 = scalar_select %p314, %s28, 1
        %p316 = scmp.lt.s32.totalorder %s29, 1
        %s317 = scalar_select %p316, %s29, 1
        %s318 = smul.addr %s315, 2
        %s319 = sadd.s32 %s317, %s318
        %s320 = smul.addr %s319, 8
        %s321 = scalar_lea.vmem %s2, %s320
        %p322 = pneg %p123
        %p323 = pneg %p120
        %p324 = scmp.lt.s32.totalorder %s28, 1
        %s325 = scalar_select %p324, %s28, 1
        %p326 = scmp.lt.s32.totalorder %s29, 1
        %s327 = scalar_select %p326, %s29, 1
        %p328 = scmp.lt.s32.totalorder %s30, 0
        %s329 = scalar_select %p328, %s30, 0
        %s330 = sadd.s32 %s329, %s327
        %s331 = smul.addr %s325, 2
        %s332 = sadd.s32 %s330, %s331
        %s333 = smul.addr %s332, 2
        %s334 = scalar_lea.vmem %s3, %s333
        %p335 = pneg %p153
        %p336 = pneg %p150
        %p337 = pneg %p183
        %p338 = pneg %p180
        %s339 = sand.u32 %s170, 1
        %s340 = scalar_lea.sflag [#allocation3], %s339
        %s341 = sand.u32 %s170, 1
        %s342 = smul.addr %s341, 8
        %s343 = scalar_lea.vmem [#allocation2], %s342
        %p344 = pneg %p213
        %p345 = pneg %p210
        %s346 = sand.u32 %s200, 1
        %s347 = scalar_lea.sflag [#allocation5], %s346
        %s348 = sand.u32 %s200, 1
        %s349 = smul.addr %s348, 8
        %s350 = scalar_lea.vmem [#allocation4], %s349
        %p351 = scmp.lt.s32.totalorder %s28, 1
        %s352 = scalar_select %p351, %s28, 1
        %p353 = scmp.lt.s32.totalorder %s29, 1
        %s354 = scalar_select %p353, %s29, 1
        %p355 = scmp.lt.s32.totalorder %s30, 0
        %s356 = scalar_select %p355, %s30, 0
        %s357 = sadd.s32 %s356, %s354
        %s358 = smul.addr %s352, 2
        %s359 = sadd.s32 %s357, %s358
        %s360 = smul.addr %s359, 8
        %s361 = scalar_lea.vmem %s0, %s360
        %p362 = scmp.lt.s32.totalorder %s28, 1
        %s363 = scalar_select %p362, %s28, 1
        %p364 = scmp.lt.s32.totalorder %s29, 1
        %s365 = scalar_select %p364, %s29, 1
        %s366 = smul.addr %s365, 4
        %s367 = smul.addr %s363, 8
        %s368 = sadd.s32 %s366, %s367
        %s369 = smul.addr %s368, 8
        %s370 = scalar_lea.vmem %s1, %s369
        %p371 = scmp.lt.s32.totalorder %s28, 1
        %s372 = scalar_select %p371, %s28, 1
        %p373 = scmp.lt.s32.totalorder %s29, 1
        %s374 = scalar_select %p373, %s29, 1
        %s375 = smul.addr %s372, 2
        %s376 = sadd.s32 %s374, %s375
        %s377 = smul.addr %s376, 8
        %s378 = scalar_lea.vmem %s2, %s377
        %p379 = scmp.lt.s32.totalorder %s28, 1
        %s380 = scalar_select %p379, %s28, 1
        %p381 = scmp.lt.s32.totalorder %s29, 1
        %s382 = scalar_select %p381, %s29, 1
        %p383 = scmp.lt.s32.totalorder %s30, 0
        %s384 = scalar_select %p383, %s30, 0
        %s385 = sadd.s32 %s384, %s382
        %s386 = smul.addr %s380, 2
        %s387 = sadd.s32 %s385, %s386
        %s388 = smul.addr %s387, 2
        %s389 = scalar_lea.vmem %s3, %s388
        %v392 = vld [vmem:[%s361] sm:$0xff]
        %v393 = vmul.f32 %v392, 0.17677669
        %v394 = vld [vmem:[%s370] sm:$0xff]
        %v395 = vld [vmem:[%s370 + $0x8] sm:$0xff]
        %v396 = vld [vmem:[%s370 + $0x10] sm:$0xff]
        %v397 = vld [vmem:[%s370 + $0x18] sm:$0xff]
        %vm398 = vcmask 261120
        %v400 = vsel %vm398, %v393, 0
        %402 = vmatprep.subr.mxu0 0.0
        %403 = vmatpush1.msra.mxu0 0.0
        %404 = vmatprep.subr.mxu0 0.0
        %405 = vmatpush1.msra.mxu0 0.0
        %406 = vmatprep.subr.mxu0 0.0
        %407 = vmatpush1.msra.mxu0 0.0
        %408 = vmatprep.subr.mxu0 0.0
        %409 = vmatpush1.msra.mxu0 0.0
        %410 = vmatprep.subr.mxu0 0.0
        %411 = vmatpush1.msra.mxu0 0.0
        %412 = vmatprep.subr.mxu0 0.0
        %413 = vmatpush1.msra.mxu0 0.0
        %414 = vmatprep.subr.mxu0 0.0
        %415 = vmatpush1.msra.mxu0 0.0
        %416 = vmatprep.subr.mxu0 0.0
        %417 = vmatpush1.msra.mxu0 0.0
        %418 = vmatprep.subr.mxu0 0.0
        %419 = vmatpush1.msra.mxu0 0.0
        %420 = vmatprep.subr.mxu0 0.0
        %421 = vmatpush1.msra.mxu0 0.0
        %422 = vmatprep.subr.mxu0 0.0
        %423 = vmatpush1.msra.mxu0 0.0
        %424 = vmatprep.subr.mxu0 0.0
        %425 = vmatpush1.msra.mxu0 0.0
        %426 = vmatprep.subr.mxu0 0.0
        %427 = vmatpush1.msra.mxu0 %v397
        %428 = vmatprep.subr.mxu0 0.0
        %429 = vmatpush1.msra.mxu0 %v396
        %430 = vmatprep.subr.mxu0 0.0
        %431 = vmatpush1.msra.mxu0 %v395
        %432 = vmatprep.subr.mxu0 0.0
        %433 = vmatpush1.msra.mxu0 %v394
        %434 = vmatprep.subr.mxu0 0.0
        %435 = vmatpush2.msra.mxu0 0.0
        %436 = vmatprep.subr.mxu0 0.0
        %437 = vmatpush2.msra.mxu0 0.0
        %438 = vmatprep.subr.mxu0 0.0
        %439 = vmatpush2.msra.mxu0 0.0
        %440 = vmatprep.subr.mxu0 0.0
        %441 = vmatpush2.msra.mxu0 0.0
        %442 = vmatprep.subr.mxu0 0.0
        %443 = vmatpush2.msra.mxu0 0.0
        %444 = vmatprep.subr.mxu0 0.0
        %445 = vmatpush2.msra.mxu0 0.0
        %446 = vmatprep.subr.mxu0 0.0
        %447 = vmatpush2.msra.mxu0 0.0
        %448 = vmatprep.subr.mxu0 0.0
        %449 = vmatpush2.msra.mxu0 0.0
        %450 = vmatprep.subr.mxu0 0.0
        %451 = vmatpush2.msra.mxu0 0.0
        %452 = vmatprep.subr.mxu0 0.0
        %453 = vmatpush2.msra.mxu0 0.0
        %454 = vmatprep.subr.mxu0 0.0
        %455 = vmatpush2.msra.mxu0 0.0
        %456 = vmatprep.subr.mxu0 0.0
        %457 = vmatpush2.msra.mxu0 0.0
        %458 = vmatprep.subr.mxu0 0.0
        %459 = vmatpush2.msra.mxu0 0.0
        %460 = vmatprep.subr.mxu0 0.0
        %461 = vmatpush2.msra.mxu0 0.0
        %462 = vmatprep.subr.mxu0 0.0
        %463 = vmatpush2.msra.mxu0 0.0
        %464 = vmatprep.subr.mxu0 0.0
        %465 = vmatpush2.msra.mxu0 0.0
        %466 = vmatprep.mubr.f32.mxu0 0.0
        %467 = vmatmul.mubr.f32.gmra.mxu0 %v400
        %v468 = vpop.f32.mrf.mxu0
        %v469 = vadd.f32 0.0, %v468
        %v470 = vpop.f32.mrf.mxu0
        %471 = vdwg.mxu0
        %v472 = vld [vmem:[%s389] sm:$0x3]
        %vm473 = vnez %v472
        %v474 = vsel %vm473, 16843009, 0
        %v475 = vunpack.c.0.s8 %v474
        %vm476 = vcmp.ne.s32.totalorder %v475, 0
        %v477 = vsel %vm476, -1e+09, %v469
        %vm478 = vcmask 64512
        %v479 = vsel %vm478, %v477, -inf
        %480 = vmax.xlane.f32.xlu0 %v479
        %v481 = vpop.xlane.xlu0 %480
        %v482 = vsub.f32 %v477, %v481
        %v483 = vmul.f32 %v482, 1.442695
        %v484 = vpow.pop %v483
        %v485 = vsel %vm478, %v484, 0.0
        %486 = vadd.xlane.f32.xlu0 %v485
        %v487 = vpop.xlane.xlu0 %486
        %v488 = vrcp.pop %v487
        %v489 = vmul.f32 %v487, %v488
        %v490 = vsub.f32 2.0, %v489
        %v491 = vmul.f32 %v488, %v490
        %v492 = vmul.f32 %v484, %v491
        %v493 = vld [vmem:[%s378] sm:$0xff]
        %v495 = vsel %vm478, %v492, 0
        %497 = vmatprep.subr.mxu0 0.0
        %498 = vmatpush1.msra.mxu0 0.0
        %499 = vmatprep.subr.mxu0 0.0
        %500 = vmatpush1.msra.mxu0 0.0
        %501 = vmatprep.subr.mxu0 0.0
        %502 = vmatpush1.msra.mxu0 0.0
        %503 = vmatprep.subr.mxu0 0.0
        %504 = vmatpush1.msra.mxu0 0.0
        %505 = vmatprep.subr.mxu0 0.0
        %506 = vmatpush1.msra.mxu0 0.0
        %507 = vmatprep.subr.mxu0 0.0
        %508 = vmatpush1.msra.mxu0 0.0
        %509 = vmatprep.subr.mxu0 0.0
        %510 = vmatpush1.msra.mxu0 0.0
        %511 = vmatprep.subr.mxu0 0.0
        %512 = vmatpush1.msra.mxu0 0.0
        %513 = vmatprep.subr.mxu0 0.0
        %514 = vmatpush1.msra.mxu0 0.0
        %515 = vmatprep.subr.mxu0 0.0
        %516 = vmatpush1.msra.mxu0 0.0
        %517 = vmatprep.subr.mxu0 0.0
        %518 = vmatpush1.msra.mxu0 0.0
        %519 = vmatprep.subr.mxu0 0.0
        %520 = vmatpush1.msra.mxu0 0.0
        %521 = vmatprep.subr.mxu0 0.0
        %522 = vmatpush1.msra.mxu0 0.0
        %523 = vmatprep.subr.mxu0 0.0
        %524 = vmatpush1.msra.mxu0 0.0
        %525 = vmatprep.subr.mxu0 0.0
        %526 = vmatpush1.msra.mxu0 0.0
        %527 = vmatprep.subr.mxu0 0.0
        %528 = vmatpush1.msra.mxu0 %v493
        %529 = vmatprep.subr.mxu0 0.0
        %530 = vmatpush2.msra.mxu0 0.0
        %531 = vmatprep.subr.mxu0 0.0
        %532 = vmatpush2.msra.mxu0 0.0
        %533 = vmatprep.subr.mxu0 0.0
        %534 = vmatpush2.msra.mxu0 0.0
        %535 = vmatprep.subr.mxu0 0.0
        %536 = vmatpush2.msra.mxu0 0.0
        %537 = vmatprep.subr.mxu0 0.0
        %538 = vmatpush2.msra.mxu0 0.0
        %539 = vmatprep.subr.mxu0 0.0
        %540 = vmatpush2.msra.mxu0 0.0
        %541 = vmatprep.subr.mxu0 0.0
        %542 = vmatpush2.msra.mxu0 0.0
        %543 = vmatprep.subr.mxu0 0.0
        %544 = vmatpush2.msra.mxu0 0.0
        %545 = vmatprep.subr.mxu0 0.0
        %546 = vmatpush2.msra.mxu0 0.0
        %547 = vmatprep.subr.mxu0 0.0
        %548 = vmatpush2.msra.mxu0 0.0
        %549 = vmatprep.subr.mxu0 0.0
        %550 = vmatpush2.msra.mxu0 0.0
        %551 = vmatprep.subr.mxu0 0.0
        %552 = vmatpush2.msra.mxu0 0.0
        %553 = vmatprep.subr.mxu0 0.0
        %554 = vmatpush2.msra.mxu0 0.0
        %555 = vmatprep.subr.mxu0 0.0
        %556 = vmatpush2.msra.mxu0 0.0
        %557 = vmatprep.subr.mxu0 0.0
        %558 = vmatpush2.msra.mxu0 0.0
        %559 = vmatprep.subr.mxu0 0.0
        %560 = vmatpush2.msra.mxu0 0.0
        %561 = vmatprep.mubr.f32.mxu0 0.0
        %562 = vmatmul.mubr.f32.gmra.mxu0 %v495
        %v563 = vpop.f32.mrf.mxu0
        %v564 = vadd.f32 0.0, %v563
        %v565 = vpop.f32.mrf.mxu0
        %566 = vdwg.mxu0
        %567 = vst.msk [vmem:[%s343] sm:$0xff] %vm398, %v564
        %568 = vst.msk [vmem:[%s350] sm:$0xff] %vm478, %v492
        %s569 = sand.u32 %s170, 1
        %s570 = scalar_lea.sflag [#allocation3], %s569
        %s571 = sand.u32 %s170, 1
        %s572 = smul.addr %s571, 8
        %s573 = scalar_lea.vmem [#allocation2], %s572
        %s574 = sand.u32 %s200, 1
        %s575 = scalar_lea.sflag [#allocation5], %s574
        %s576 = sand.u32 %s200, 1
        %s577 = smul.addr %s576, 8
        %s578 = scalar_lea.vmem [#allocation4], %s577
        // Predicated region
        $region37: #{tpu_custom_call.1} parent=35 // pred_check
          %p579 = pneg %p180
        $region38: #{tpu_custom_call.1} parent=35 // pred_check_branch
          %581 = sbr.rel (%p579) target = $region40
        $region39: #{tpu_custom_call.1} parent=35 // pred_region
          %s583 = ssub.s32 128, 128
          %584 = vsyncadd %s570, %s583
          %s585 = sadd.s32 %s30, %s29
          %s586 = smul.addr %s28, 2
          %s587 = sadd.s32 %s585, %s586
          %s588 = smul.addr %s587, 128
          %s589 = scalar_lea.hbm %s4, %s588
          %s591 = sshll.u32 %s573, 4
          %s592 = int_to_ptr.vmem [resolvable:$true] %s591
          %594 = dma.vmem_to_hbm [thread:$0]  %s592, 128, %s589, %s570
        $region40: #{tpu_custom_call.1} parent=35 // pred_fallthru
          _
        // Predicated region
        $region41: #{tpu_custom_call.1} parent=35 // pred_check
          %p595 = pneg %p210
        $region42: #{tpu_custom_call.1} parent=35 // pred_check_branch
          %597 = sbr.rel (%p595) target = $region44
        $region43: #{tpu_custom_call.1} parent=35 // pred_region
          %s599 = ssub.s32 128, 128
          %600 = vsyncadd %s575, %s599
          %s601 = sadd.s32 %s30, %s29
          %s602 = smul.addr %s28, 2
          %s603 = sadd.s32 %s601, %s602
          %s604 = smul.addr %s603, 128
          %s605 = scalar_lea.hbm %s5, %s604
          %s607 = sshll.u32 %s578, 4
          %s608 = int_to_ptr.vmem [resolvable:$true] %s607
          %610 = dma.vmem_to_hbm [thread:$0]  %s608, 128, %s605, %s575
        $region44: #{tpu_custom_call.1} parent=35 // pred_fallthru
          _
      $region36: #{tpu_custom_call.1} parent=5 // pred_fallthru
        _
      %p611 = scmp.le.s32.totalorder 2, %s18
      // Predicated region
      $region45: #{tpu_custom_call.1} parent=5 // pred_check
        %p612 = pneg %p611
      $region46: #{tpu_custom_call.1} parent=5 // pred_check_branch
        %614 = sbr.rel (%p612) target = $region48
      $region47: #{tpu_custom_call.1} parent=5 // pred_region
        %s615 = ssub.s32 %s18, 2
        // Predicated region
        $region49: #{tpu_custom_call.1} parent=47 // pred_check
          %p616 = pneg %p186
        $region50: #{tpu_custom_call.1} parent=47 // pred_check_branch
          %618 = sbr.rel (%p616) target = $region52
        $region51: #{tpu_custom_call.1} parent=47 // pred_region
          %s619 = sand.u32 %s171, 1
          %s620 = scalar_lea.sflag [#allocation3], %s619
          %s621 = sand.u32 %s171, 1
          %s622 = smul.addr %s621, 8
          %s623 = scalar_lea.vmem [#allocation2], %s622
          %624 = dma.done %s620, 128
        $region52: #{tpu_custom_call.1} parent=47 // pred_fallthru
          _
        // Predicated region
        $region53: #{tpu_custom_call.1} parent=47 // pred_check
          %p625 = pneg %p216
        $region54: #{tpu_custom_call.1} parent=47 // pred_check_branch
          %627 = sbr.rel (%p625) target = $region56
        $region55: #{tpu_custom_call.1} parent=47 // pred_region
          %s628 = sand.u32 %s201, 1
          %s629 = scalar_lea.sflag [#allocation5], %s628
          %s630 = sand.u32 %s201, 1
          %s631 = smul.addr %s630, 8
          %s632 = scalar_lea.vmem [#allocation4], %s631
          %633 = dma.done %s629, 128
        $region56: #{tpu_custom_call.1} parent=47 // pred_fallthru
          _
      $region48: #{tpu_custom_call.1} parent=5 // pred_fallthru
        _
    $region6: #{tpu_custom_call.1} parent=1 // loop_footer
      %s22 = sadd.s32 1, %s18
    $region7: #{tpu_custom_call.1} parent=1 // loop_footer_branch
      %17 = sbr.rel target = $region3
    $region8: #{tpu_custom_call.1} parent=1 // loop_exit
      _
    %634 = vsyncpa [#allocation3], 1
    %s635 = scalar_lea.sflag [#allocation3], 1
    %636 = vsyncpa %s635, 1
    %637 = vsyncpa [#allocation5], 1
    %s638 = scalar_lea.sflag [#allocation5], 1
    %639 = vsyncpa %s638, 1

</llo_original>
